<compile_context>
chip_gen: v6e
topology: v6e:2x2x1
jax: 0.10.0
libtpu: 0.0.40
codegen_flags: <defaults>
</compile_context>

<pallas_src>
import jax
import jax.numpy as jnp
from jax.experimental import pallas as pl
from jax.experimental.pallas import tpu as pltpu

EPS = 1e-5
LANE = 128   # TPU lane width: every feature dim is padded to this


def fc_kernel(x_ref, w1_ref, w2_ref, w3_ref, vec_ref, scal_ref, out_ref):
    """Single-shot forward; all feature dims are lane-padded to LANE.

    vec_ref rows: 0=gamma1, 1=beta1, 2=gamma2, 3=beta2, 4=b3 (rows 5..7 = zero pad)
    scal_ref:     [prelu_a1, prelu_a2, coeff]   (SMEM)
    Linear biases b1/b2 are intentionally absent: bias-before-batch-stat-BN is a
    mathematical no-op (removed by the mean subtraction).
    """
    x = x_ref[...]                                       # (B, LANE) f32

    g1, be1 = vec_ref[0:1, :], vec_ref[1:2, :]
    g2, be2 = vec_ref[2:3, :], vec_ref[3:4, :]
    b3 = vec_ref[4:5, :]
    a1, a2, c = scal_ref[0], scal_ref[1], scal_ref[2]

    def bn_prelu(h, g, be, a):
        mu = jnp.mean(h, axis=0, keepdims=True)
        hc = h - mu                                      # centered once, reused twice
        var = jnp.mean(hc * hc, axis=0, keepdims=True)   # biased variance (training mode)
        hn = hc * jax.lax.rsqrt(var + EPS) * g + be
        return jnp.where(hn > 0.0, hn, a * hn)           # PReLU, shared scalar slope

    # ---- layer1: Linear (bias folded away) -> BN(batch stats) -> PReLU -----
    h = bn_prelu(jnp.dot(x, w1_ref[...], preferred_element_type=jnp.float32),
                 g1, be1, a1)
    # ---- layer2 -------------------------------------------------------------
    h = bn_prelu(jnp.dot(h, w2_ref[...], preferred_element_type=jnp.float32),
                 g2, be2, a2)
    # ---- layer3: Linear (bias kept, no BN after it) --------------------------
    y = jnp.dot(h, w3_ref[...], preferred_element_type=jnp.float32) + b3
    # ---- residual mix: coeff * y + (1 - coeff) * X ---------------------------
    out_ref[...] = c * y + (1.0 - c) * x


def _pad2(a, rows, cols):
    return jnp.pad(a, ((0, rows - a.shape[0]), (0, cols - a.shape[1])))


def fully_connected_forward(x, params):
    """x: (B, in_dim) f32.  params: dict of f32 arrays (see init_params)."""
    B, in_dim = x.shape
    h1 = params["w1"].shape[1]
    h2 = params["w2"].shape[1]
    out_dim = params["w3"].shape[1]
    assert out_dim == in_dim, "residual mix requires out_dim == in_dim"

    P = LANE
    # Lane-pad activations and weights to 128-wide tiles.
    x_p = _pad2(x, B, P)
    w1_p = _pad2(params["w1"], P, P)
    w2_p = _pad2(params["w2"], P, P)
    w3_p = _pad2(params["w3"], P, P)

    # Pack all per-feature vectors into one (8, P) VMEM tile -> one DMA.
    vec = jnp.zeros((8, P), jnp.float32)
    vec = vec.at[0, :h1].set(params["g1"].reshape(-1))
    vec = vec.at[1, :h1].set(params["be1"].reshape(-1))
    vec = vec.at[2, :h2].set(params["g2"].reshape(-1))
    vec = vec.at[3, :h2].set(params["be2"].reshape(-1))
    vec = vec.at[4, :out_dim].set(params["b3"].reshape(-1))

    # Pack the three scalars into one SMEM array -> one descriptor.
    scal = jnp.stack([params["a1"].reshape(()),
                      params["a2"].reshape(()),
                      params["coeff"].reshape(())])

    vmem = pl.BlockSpec(memory_space=pltpu.MemorySpace.VMEM)
    smem = pl.BlockSpec(memory_space=pltpu.MemorySpace.SMEM)

    out_p = pl.pallas_call(
        fc_kernel,
        out_shape=jax.ShapeDtypeStruct((B, P), jnp.float32),
        in_specs=[vmem, vmem, vmem, vmem, vmem, smem],
        out_specs=vmem,
    )(x_p, w1_p, w2_p, w3_p, vec, scal)

    return out_p[:, :out_dim]


def init_params(key, in_dim, hid_dim1, hid_dim2, out_dim, par):
    """Deterministic synthetic init (PyTorch-like scales); weights stored as (in, out)."""
    ks = jax.random.split(key, 6)

    def lin(kw, kb, fan_in, fan_out):
        bound = 1.0 / jnp.sqrt(fan_in)
        w = jax.random.uniform(kw, (fan_in, fan_out), jnp.float32, -bound, bound)
        b = jax.random.uniform(kb, (1, fan_out), jnp.float32, -bound, bound)
        return w, b

    w1, b1 = lin(ks[0], ks[1], in_dim, hid_dim1)
    w2, b2 = lin(ks[2], ks[3], hid_dim1, hid_dim2)
    w3, b3 = lin(ks[4], ks[5], hid_dim2, out_dim)

    return dict(
        w1=w1, b1=b1,   # b1/b2 kept for parity with the nn.Module; unused by the kernel
        g1=jnp.ones((1, hid_dim1), jnp.float32), be1=jnp.zeros((1, hid_dim1), jnp.float32),
        a1=jnp.full((1,), 0.25, jnp.float32),           # PReLU default init
        w2=w2, b2=b2,
        g2=jnp.ones((1, hid_dim2), jnp.float32), be2=jnp.zeros((1, hid_dim2), jnp.float32),
        a2=jnp.full((1,), 0.25, jnp.float32),
        w3=w3, b3=b3,
        coeff=jnp.full((1,), par, jnp.float32),
    )


def reference_forward(x, p):
    """Pure-JAX reference with the module's exact semantics (biases included)."""
    def bn_prelu(h, g, be, a):
        mu = jnp.mean(h, axis=0, keepdims=True)
        var = jnp.mean((h - mu) ** 2, axis=0, keepdims=True)
        h = (h - mu) / jnp.sqrt(var + EPS) * g + be
        return jnp.where(h > 0, h, a[0] * h)

    h = bn_prelu(x @ p["w1"] + p["b1"], p["g1"], p["be1"], p["a1"])
    h = bn_prelu(h @ p["w2"] + p["b2"], p["g2"], p["be2"], p["a2"])
    y = h @ p["w3"] + p["b3"]
    c = p["coeff"][0]
    return c * y + (1.0 - c) * x


if __name__ == "__main__":
    # Residual connection requires out_dim == in_dim.
    B, in_dim, hid_dim1, hid_dim2, out_dim = 8, 32, 64, 48, 32
    par = 0.7

    key = jax.random.PRNGKey(0)
    kx, kp = jax.random.split(key)
    x = jax.random.normal(kx, (B, in_dim), jnp.float32)
    params = init_params(kp, in_dim, hid_dim1, hid_dim2, out_dim, par)

    out = fully_connected_forward(x, params)
    out = jax.block_until_ready(out)

    ref = reference_forward(x, params)
    assert out.shape == (B, out_dim)
    assert jnp.allclose(out, ref, atol=1e-4, rtol=1e-4), "mismatch vs reference"

    print("KERNEL_OK")
</pallas_src>

<mosaic_0001>
module attributes {stable_mosaic.version = 11 : i64} {
  func.func @fc_kernel(%arg0: memref<8x128xf32, #tpu.memory_space<vmem>>, %arg1: memref<128x128xf32, #tpu.memory_space<vmem>>, %arg2: memref<128x128xf32, #tpu.memory_space<vmem>>, %arg3: memref<128x128xf32, #tpu.memory_space<vmem>>, %arg4: memref<8x128xf32, #tpu.memory_space<vmem>>, %arg5: memref<3xf32, #tpu.memory_space<smem>>, %arg6: memref<8x128xf32, #tpu.memory_space<vmem>>) attributes {dimension_semantics = [], scalar_prefetch = 0 : i64, scratch_operands = 0 : i64, tpu.core_type = #tpu.core_type<tc>} {
    %c0 = arith.constant 0 : index
    %c0_0 = arith.constant 0 : index
    %0 = vector.load %arg0[%c0, %c0_0] : memref<8x128xf32, #tpu.memory_space<vmem>>, vector<8x128xf32>
    %c0_1 = arith.constant 0 : index
    %c0_2 = arith.constant 0 : index
    %1 = vector.load %arg4[%c0_1, %c0_2] : memref<8x128xf32, #tpu.memory_space<vmem>>, vector<1x128xf32>
    %c1 = arith.constant 1 : index
    %c0_3 = arith.constant 0 : index
    %2 = vector.load %arg4[%c1, %c0_3] : memref<8x128xf32, #tpu.memory_space<vmem>>, vector<1x128xf32>
    %c2 = arith.constant 2 : index
    %c0_4 = arith.constant 0 : index
    %3 = vector.load %arg4[%c2, %c0_4] : memref<8x128xf32, #tpu.memory_space<vmem>>, vector<1x128xf32>
    %c3 = arith.constant 3 : index
    %c0_5 = arith.constant 0 : index
    %4 = vector.load %arg4[%c3, %c0_5] : memref<8x128xf32, #tpu.memory_space<vmem>>, vector<1x128xf32>
    %c4 = arith.constant 4 : index
    %c0_6 = arith.constant 0 : index
    %5 = vector.load %arg4[%c4, %c0_6] : memref<8x128xf32, #tpu.memory_space<vmem>>, vector<1x128xf32>
    %c0_7 = arith.constant 0 : index
    %6 = memref.load %arg5[%c0_7] : memref<3xf32, #tpu.memory_space<smem>>
    %c1_8 = arith.constant 1 : index
    %7 = memref.load %arg5[%c1_8] : memref<3xf32, #tpu.memory_space<smem>>
    %c2_9 = arith.constant 2 : index
    %8 = memref.load %arg5[%c2_9] : memref<3xf32, #tpu.memory_space<smem>>
    %c0_10 = arith.constant 0 : index
    %c0_11 = arith.constant 0 : index
    %9 = vector.load %arg1[%c0_10, %c0_11] : memref<128x128xf32, #tpu.memory_space<vmem>>, vector<128x128xf32>
    %cst = arith.constant dense<0.000000e+00> : vector<8x128xf32>
    %10 = tpu.matmul %0, %9, %cst {dimension_numbers = #tpu.dot_dimension_numbers<[1], [0], [0], [1], [0, 0, 1, 1], [], []>} : vector<8x128xf32>, vector<128x128xf32>, vector<8x128xf32> -> vector<8x128xf32>
    %cst_12 = arith.constant dense<0.000000e+00> : vector<128xf32>
    %11 = vector.multi_reduction <add>, %10, %cst_12 [0] : vector<8x128xf32> to vector<128xf32>
    %12 = vector.shape_cast %11 : vector<128xf32> to vector<1x128xf32>
    %cst_13 = arith.constant 8.000000e+00 : f32
    %13 = vector.broadcast %cst_13 : f32 to vector<1x128xf32>
    %14 = arith.divf %12, %13 : vector<1x128xf32>
    %15 = vector.broadcast %14 : vector<1x128xf32> to vector<8x128xf32>
    %16 = arith.subf %10, %15 : vector<8x128xf32>
    %17 = arith.mulf %16, %16 : vector<8x128xf32>
    %cst_14 = arith.constant dense<0.000000e+00> : vector<128xf32>
    %18 = vector.multi_reduction <add>, %17, %cst_14 [0] : vector<8x128xf32> to vector<128xf32>
    %19 = vector.shape_cast %18 : vector<128xf32> to vector<1x128xf32>
    %cst_15 = arith.constant 8.000000e+00 : f32
    %20 = vector.broadcast %cst_15 : f32 to vector<1x128xf32>
    %21 = arith.divf %19, %20 : vector<1x128xf32>
    %cst_16 = arith.constant 9.99999974E-6 : f32
    %22 = vector.broadcast %cst_16 : f32 to vector<1x128xf32>
    %23 = arith.addf %21, %22 : vector<1x128xf32>
    %24 = math.rsqrt %23 : vector<1x128xf32>
    %25 = vector.broadcast %24 : vector<1x128xf32> to vector<8x128xf32>
    %26 = arith.mulf %16, %25 : vector<8x128xf32>
    %27 = vector.broadcast %1 : vector<1x128xf32> to vector<8x128xf32>
    %28 = arith.mulf %26, %27 : vector<8x128xf32>
    %29 = vector.broadcast %2 : vector<1x128xf32> to vector<8x128xf32>
    %30 = arith.addf %28, %29 : vector<8x128xf32>
    %cst_17 = arith.constant 0.000000e+00 : f32
    %31 = vector.broadcast %cst_17 : f32 to vector<8x128xf32>
    %32 = arith.cmpf ogt, %30, %31 : vector<8x128xf32>
    %33 = vector.broadcast %6 : f32 to vector<8x128xf32>
    %34 = arith.mulf %33, %30 : vector<8x128xf32>
    %35 = arith.select %32, %30, %34 : vector<8x128xi1>, vector<8x128xf32>
    %c0_18 = arith.constant 0 : index
    %c0_19 = arith.constant 0 : index
    %36 = vector.load %arg2[%c0_18, %c0_19] : memref<128x128xf32, #tpu.memory_space<vmem>>, vector<128x128xf32>
    %cst_20 = arith.constant dense<0.000000e+00> : vector<8x128xf32>
    %37 = tpu.matmul %35, %36, %cst_20 {dimension_numbers = #tpu.dot_dimension_numbers<[1], [0], [0], [1], [0, 0, 1, 1], [], []>} : vector<8x128xf32>, vector<128x128xf32>, vector<8x128xf32> -> vector<8x128xf32>
    %cst_21 = arith.constant dense<0.000000e+00> : vector<128xf32>
    %38 = vector.multi_reduction <add>, %37, %cst_21 [0] : vector<8x128xf32> to vector<128xf32>
    %39 = vector.shape_cast %38 : vector<128xf32> to vector<1x128xf32>
    %cst_22 = arith.constant 8.000000e+00 : f32
    %40 = vector.broadcast %cst_22 : f32 to vector<1x128xf32>
    %41 = arith.divf %39, %40 : vector<1x128xf32>
    %42 = vector.broadcast %41 : vector<1x128xf32> to vector<8x128xf32>
    %43 = arith.subf %37, %42 : vector<8x128xf32>
    %44 = arith.mulf %43, %43 : vector<8x128xf32>
    %cst_23 = arith.constant dense<0.000000e+00> : vector<128xf32>
    %45 = vector.multi_reduction <add>, %44, %cst_23 [0] : vector<8x128xf32> to vector<128xf32>
    %46 = vector.shape_cast %45 : vector<128xf32> to vector<1x128xf32>
    %cst_24 = arith.constant 8.000000e+00 : f32
    %47 = vector.broadcast %cst_24 : f32 to vector<1x128xf32>
    %48 = arith.divf %46, %47 : vector<1x128xf32>
    %cst_25 = arith.constant 9.99999974E-6 : f32
    %49 = vector.broadcast %cst_25 : f32 to vector<1x128xf32>
    %50 = arith.addf %48, %49 : vector<1x128xf32>
    %51 = math.rsqrt %50 : vector<1x128xf32>
    %52 = vector.broadcast %51 : vector<1x128xf32> to vector<8x128xf32>
    %53 = arith.mulf %43, %52 : vector<8x128xf32>
    %54 = vector.broadcast %3 : vector<1x128xf32> to vector<8x128xf32>
    %55 = arith.mulf %53, %54 : vector<8x128xf32>
    %56 = vector.broadcast %4 : vector<1x128xf32> to vector<8x128xf32>
    %57 = arith.addf %55, %56 : vector<8x128xf32>
    %cst_26 = arith.constant 0.000000e+00 : f32
    %58 = vector.broadcast %cst_26 : f32 to vector<8x128xf32>
    %59 = arith.cmpf ogt, %57, %58 : vector<8x128xf32>
    %60 = vector.broadcast %7 : f32 to vector<8x128xf32>
    %61 = arith.mulf %60, %57 : vector<8x128xf32>
    %62 = arith.select %59, %57, %61 : vector<8x128xi1>, vector<8x128xf32>
    %c0_27 = arith.constant 0 : index
    %c0_28 = arith.constant 0 : index
    %63 = vector.load %arg3[%c0_27, %c0_28] : memref<128x128xf32, #tpu.memory_space<vmem>>, vector<128x128xf32>
    %cst_29 = arith.constant dense<0.000000e+00> : vector<8x128xf32>
    %64 = tpu.matmul %62, %63, %cst_29 {dimension_numbers = #tpu.dot_dimension_numbers<[1], [0], [0], [1], [0, 0, 1, 1], [], []>} : vector<8x128xf32>, vector<128x128xf32>, vector<8x128xf32> -> vector<8x128xf32>
    %65 = vector.broadcast %5 : vector<1x128xf32> to vector<8x128xf32>
    %66 = arith.addf %64, %65 : vector<8x128xf32>
    %67 = vector.broadcast %8 : f32 to vector<8x128xf32>
    %68 = arith.mulf %67, %66 : vector<8x128xf32>
    %cst_30 = arith.constant 1.000000e+00 : f32
    %69 = arith.subf %cst_30, %8 : f32
    %70 = vector.broadcast %69 : f32 to vector<8x128xf32>
    %71 = arith.mulf %70, %0 : vector<8x128xf32>
    %72 = arith.addf %68, %71 : vector<8x128xf32>
    %c0_31 = arith.constant 0 : index
    %c0_32 = arith.constant 0 : index
    %73 = vector.load %arg6[%c0_31, %c0_32] : memref<8x128xf32, #tpu.memory_space<vmem>>, vector<8x128xf32>
    tpu.vector_store %arg6[%c0_31, %c0_32], %72 {strides = array<i32>} : memref<8x128xf32, #tpu.memory_space<vmem>>, vector<8x128xf32>,
    return
  }
}

</mosaic_0001>

<llo_original>
// kernel: tpu_custom_call.1
$region0: #{tpu_custom_call.1}
  #allocation0 [shape = 'u32[]', space=smem, size = 0x4, offset = 0x4, fixed_abs, tag = 'smem constant byte address 0x4 - core index']
  #allocation1 [shape = 'u32[144,128]{1,0:T(1,128)}', space=vmem, size = 0x12000, scoped, tag = 'internal scratch']
  %s0 = inlined_call_operand.hbm [shape: f32[8,128], index: 0, kind: input, shape index: {}]
  %s1 = inlined_call_operand.hbm [shape: f32[128,128], index: 1, kind: input, shape index: {}]
  %s2 = inlined_call_operand.hbm [shape: f32[128,128], index: 2, kind: input, shape index: {}]
  %s3 = inlined_call_operand.hbm [shape: f32[128,128], index: 3, kind: input, shape index: {}]
  %s4 = inlined_call_operand.hbm [shape: f32[8,128], index: 4, kind: input, shape index: {}]
  %s5 = inlined_call_operand.vmem [shape: f32[3], index: 5, kind: input, shape index: {}]
  %s6 = inlined_call_operand.hbm [shape: f32[8,128], index: 6, kind: output, shape index: {}]
  %s7 = sld [smem:[#allocation0]]
  $region58: #{tpu_custom_call.1} parent=0
    _
  %s9 = ssub.s32 1, %s7
  %s10 = scalar_select 0, %s9, %s7
  $region1: #{tpu_custom_call.1} parent=0
    #allocation2 [shape = 'u8[4096]{0}', space=vmem, size = 0x1000, scoped, tag = 'input window, operand 0, single buffered']
    #allocation3 [shape = 's32[1]{0}', space=sflag, size = 0x4, scoped, tag = 'scoped memory for tpu_custom_call.1']
    #allocation4 [shape = 's32[1]{0}', space=sflag, size = 0x4, scoped, tag = 'scoped memory for tpu_custom_call.1']
    #allocation5 [shape = 's32[1]{0}', space=sflag, size = 0x4, scoped, tag = 'scoped memory for tpu_custom_call.1']
    #allocation6 [shape = 'u8[65536]{0}', space=vmem, size = 0x10000, scoped, tag = 'input window, operand 1, single buffered']
    #allocation7 [shape = 's32[1]{0}', space=sflag, size = 0x4, scoped, tag = 'scoped memory for tpu_custom_call.1']
    #allocation8 [shape = 'u8[65536]{0}', space=vmem, size = 0x10000, scoped, tag = 'input window, operand 2, single buffered']
    #allocation9 [shape = 'u8[65536]{0}', space=vmem, size = 0x10000, scoped, tag = 'input window, operand 3, single buffered']
    #allocation10 [shape = 's32[1]{0}', space=sflag, size = 0x4, scoped, tag = 'scoped memory for tpu_custom_call.1']
    #allocation11 [shape = 'u8[4096]{0}', space=vmem, size = 0x1000, scoped, tag = 'input window, operand 4, single buffered']
    #allocation12 [shape = 'u8[512]{0}', space=smem, size = 0x200, scoped, tag = 'input window, operand 5, single buffered']
    #allocation13 [shape = 'u8[4096]{0}', space=vmem, size = 0x1000, scoped, tag = 'output window, operand 0, single buffered']
    %11 = vsyncpa [#allocation3], 0
    %12 = vsyncpa [#allocation7], 0
    %13 = vsyncpa [#allocation10], 0
    %14 = vsyncpa [#allocation5], 0
    %15 = vsyncpa [#allocation4], 0
    // Predicated region
    $region2: #{tpu_custom_call.1} parent=1 // pred_check
      _
    $region3: #{tpu_custom_call.1} parent=1 // pred_check_branch
      %17 = sbr.rel (0) target = $region5
    $region4: #{tpu_custom_call.1} parent=1 // pred_region
      %s19 = ssub.s32 128, 128
      %20 = vsyncadd [#allocation3], %s19
      %s22 = sshll.u32 [#allocation2], 4
      %s23 = int_to_ptr.vmem [resolvable:$true] %s22
      %25 = dma.hbm_to_vmem [thread:$0]  %s0, 128, %s23, [#allocation3]
    $region5: #{tpu_custom_call.1} parent=1 // pred_fallthru
      _
    // Predicated region
    $region6: #{tpu_custom_call.1} parent=1 // pred_check
      _
    $region7: #{tpu_custom_call.1} parent=1 // pred_check_branch
      %27 = sbr.rel (0) target = $region9
    $region8: #{tpu_custom_call.1} parent=1 // pred_region
      %s29 = ssub.s32 2048, 2048
      %30 = vsyncadd [#allocation7], %s29
      %s31 = sshll.u32 [#allocation6], 4
      %s32 = int_to_ptr.vmem [resolvable:$true] %s31
      %37 = dma.hbm_to_vmem [thread:$0]  %s1, 2048, %s32, [#allocation7], 128, 128, 8
    $region9: #{tpu_custom_call.1} parent=1 // pred_fallthru
      _
    // Predicated region
    $region10: #{tpu_custom_call.1} parent=1 // pred_check
      _
    $region11: #{tpu_custom_call.1} parent=1 // pred_check_branch
      %39 = sbr.rel (0) target = $region13
    $region12: #{tpu_custom_call.1} parent=1 // pred_region
      %s41 = ssub.s32 2048, 2048
      %42 = vsyncadd [#allocation7], %s41
      %s43 = sshll.u32 [#allocation8], 4
      %s44 = int_to_ptr.vmem [resolvable:$true] %s43
      %49 = dma.hbm_to_vmem [thread:$0]  %s2, 2048, %s44, [#allocation7], 128, 128, 8
    $region13: #{tpu_custom_call.1} parent=1 // pred_fallthru
      _
    // Predicated region
    $region14: #{tpu_custom_call.1} parent=1 // pred_check
      _
    $region15: #{tpu_custom_call.1} parent=1 // pred_check_branch
      %51 = sbr.rel (0) target = $region17
    $region16: #{tpu_custom_call.1} parent=1 // pred_region
      %s53 = ssub.s32 2048, 2048
      %54 = vsyncadd [#allocation10], %s53
      %s55 = sshll.u32 [#allocation9], 4
      %s56 = int_to_ptr.vmem [resolvable:$true] %s55
      %61 = dma.hbm_to_vmem [thread:$0]  %s3, 2048, %s56, [#allocation10], 128, 128, 8
    $region17: #{tpu_custom_call.1} parent=1 // pred_fallthru
      _
    // Predicated region
    $region18: #{tpu_custom_call.1} parent=1 // pred_check
      _
    $region19: #{tpu_custom_call.1} parent=1 // pred_check_branch
      %63 = sbr.rel (0) target = $region21
    $region20: #{tpu_custom_call.1} parent=1 // pred_region
      %s65 = ssub.s32 128, 128
      %66 = vsyncadd [#allocation10], %s65
      %s68 = sshll.u32 [#allocation11], 4
      %s69 = int_to_ptr.vmem [resolvable:$true] %s68
      %71 = dma.hbm_to_vmem [thread:$0]  %s4, 128, %s69, [#allocation10]
    $region21: #{tpu_custom_call.1} parent=1 // pred_fallthru
      _
    // Predicated region
    $region22: #{tpu_custom_call.1} parent=1 // pred_check
      _
    $region23: #{tpu_custom_call.1} parent=1 // pred_check_branch
      %73 = sbr.rel (0) target = $region25
    $region24: #{tpu_custom_call.1} parent=1 // pred_region
      %s75 = ssub.s32 16, 16
      %76 = vsyncadd [#allocation5], %s75
      %s78 = sshll.u32 %s5, 4
      %s79 = int_to_ptr.vmem [resolvable:$true] %s78
      %81 = dma.vmem_to_smem %s79, 16, [#allocation12], [#allocation5]
    $region25: #{tpu_custom_call.1} parent=1 // pred_fallthru
      _
    // Predicated region
    $region26: #{tpu_custom_call.1} parent=1 // pred_check
      _
    $region27: #{tpu_custom_call.1} parent=1 // pred_check_branch
      %83 = sbr.rel (0) target = $region29
    $region28: #{tpu_custom_call.1} parent=1 // pred_region
      %84 = dma.done [#allocation3], 128
    $region29: #{tpu_custom_call.1} parent=1 // pred_fallthru
      _
    // Predicated region
    $region30: #{tpu_custom_call.1} parent=1 // pred_check
      _
    $region31: #{tpu_custom_call.1} parent=1 // pred_check_branch
      %86 = sbr.rel (0) target = $region33
    $region32: #{tpu_custom_call.1} parent=1 // pred_region
      %87 = dma.done [#allocation7], 2048
    $region33: #{tpu_custom_call.1} parent=1 // pred_fallthru
      _
    // Predicated region
    $region34: #{tpu_custom_call.1} parent=1 // pred_check
      _
    $region35: #{tpu_custom_call.1} parent=1 // pred_check_branch
      %89 = sbr.rel (0) target = $region37
    $region36: #{tpu_custom_call.1} parent=1 // pred_region
      %90 = dma.done [#allocation7], 2048
    $region37: #{tpu_custom_call.1} parent=1 // pred_fallthru
      _
    // Predicated region
    $region38: #{tpu_custom_call.1} parent=1 // pred_check
      _
    $region39: #{tpu_custom_call.1} parent=1 // pred_check_branch
      %92 = sbr.rel (0) target = $region41
    $region40: #{tpu_custom_call.1} parent=1 // pred_region
      %93 = dma.done [#allocation10], 2048
    $region41: #{tpu_custom_call.1} parent=1 // pred_fallthru
      _
    // Predicated region
    $region42: #{tpu_custom_call.1} parent=1 // pred_check
      _
    $region43: #{tpu_custom_call.1} parent=1 // pred_check_branch
      %95 = sbr.rel (0) target = $region45
    $region44: #{tpu_custom_call.1} parent=1 // pred_region
      %96 = dma.done [#allocation10], 128
    $region45: #{tpu_custom_call.1} parent=1 // pred_fallthru
      _
    // Predicated region
    $region46: #{tpu_custom_call.1} parent=1 // pred_check
      _
    $region47: #{tpu_custom_call.1} parent=1 // pred_check_branch
      %98 = sbr.rel (0) target = $region49
    $region48: #{tpu_custom_call.1} parent=1 // pred_region
      %99 = dma.done [#allocation5], 16
    $region49: #{tpu_custom_call.1} parent=1 // pred_fallthru
      _
    %100 = sfence
    %v101 = vld [vmem:[#allocation2] sm:$0xff]
    %v102 = vld [vmem:[#allocation11] sm:$0x1]
    %v103 = vld [vmem:[#allocation11 + $0x1] sm:$0x1]
    %v104 = vld [vmem:[#allocation11 + $0x2] sm:$0x1]
    %v105 = vld [vmem:[#allocation11 + $0x3] sm:$0x1]
    %v106 = vld [vmem:[#allocation11 + $0x4] sm:$0x1]
    %s107 = sld [smem:[#allocation12]]
    %s108 = sld [smem:[#allocation12 + $0x1]]
    %s109 = sld [smem:[#allocation12 + $0x2]]
    %v110 = vld [vmem:[#allocation6] sm:$0xff]
    %v111 = vld [vmem:[#allocation6 + $0x8] sm:$0xff]
    %v112 = vld [vmem:[#allocation6 + $0x10] sm:$0xff]
    %v113 = vld [vmem:[#allocation6 + $0x18] sm:$0xff]
    %v114 = vld [vmem:[#allocation6 + $0x20] sm:$0xff]
    %v115 = vld [vmem:[#allocation6 + $0x28] sm:$0xff]
    %v116 = vld [vmem:[#allocation6 + $0x30] sm:$0xff]
    %v117 = vld [vmem:[#allocation6 + $0x38] sm:$0xff]
    %v118 = vld [vmem:[#allocation6 + $0x40] sm:$0xff]
    %v119 = vld [vmem:[#allocation6 + $0x48] sm:$0xff]
    %v120 = vld [vmem:[#allocation6 + $0x50] sm:$0xff]
    %v121 = vld [vmem:[#allocation6 + $0x58] sm:$0xff]
    %v122 = vld [vmem:[#allocation6 + $0x60] sm:$0xff]
    %v123 = vld [vmem:[#allocation6 + $0x68] sm:$0xff]
    %v124 = vld [vmem:[#allocation6 + $0x70] sm:$0xff]
    %v125 = vld [vmem:[#allocation6 + $0x78] sm:$0xff]
    %126 = vmatprep.subr.mxu0 0.0
    %127 = vmatpush1.msra.mxu0 %v125
    %128 = vmatprep.subr.mxu0 0.0
    %129 = vmatpush1.msra.mxu0 %v124
    %130 = vmatprep.subr.mxu0 0.0
    %131 = vmatpush1.msra.mxu0 %v123
    %132 = vmatprep.subr.mxu0 0.0
    %133 = vmatpush1.msra.mxu0 %v122
    %134 = vmatprep.subr.mxu0 0.0
    %135 = vmatpush1.msra.mxu0 %v121
    %136 = vmatprep.subr.mxu0 0.0
    %137 = vmatpush1.msra.mxu0 %v120
    %138 = vmatprep.subr.mxu0 0.0
    %139 = vmatpush1.msra.mxu0 %v119
    %140 = vmatprep.subr.mxu0 0.0
    %141 = vmatpush1.msra.mxu0 %v118
    %142 = vmatprep.subr.mxu0 0.0
    %143 = vmatpush1.msra.mxu0 %v117
    %144 = vmatprep.subr.mxu0 0.0
    %145 = vmatpush1.msra.mxu0 %v116
    %146 = vmatprep.subr.mxu0 0.0
    %147 = vmatpush1.msra.mxu0 %v115
    %148 = vmatprep.subr.mxu0 0.0
    %149 = vmatpush1.msra.mxu0 %v114
    %150 = vmatprep.subr.mxu0 0.0
    %151 = vmatpush1.msra.mxu0 %v113
    %152 = vmatprep.subr.mxu0 0.0
    %153 = vmatpush1.msra.mxu0 %v112
    %154 = vmatprep.subr.mxu0 0.0
    %155 = vmatpush1.msra.mxu0 %v111
    %156 = vmatprep.subr.mxu0 0.0
    %157 = vmatpush1.msra.mxu0 %v110
    %158 = vmatprep.subr.mxu0 0.0
    %159 = vmatpush2.msra.mxu0 0.0
    %160 = vmatprep.subr.mxu0 0.0
    %161 = vmatpush2.msra.mxu0 0.0
    %162 = vmatprep.subr.mxu0 0.0
    %163 = vmatpush2.msra.mxu0 0.0
    %164 = vmatprep.subr.mxu0 0.0
    %165 = vmatpush2.msra.mxu0 0.0
    %166 = vmatprep.subr.mxu0 0.0
    %167 = vmatpush2.msra.mxu0 0.0
    %168 = vmatprep.subr.mxu0 0.0
    %169 = vmatpush2.msra.mxu0 0.0
    %170 = vmatprep.subr.mxu0 0.0
    %171 = vmatpush2.msra.mxu0 0.0
    %172 = vmatprep.subr.mxu0 0.0
    %173 = vmatpush2.msra.mxu0 0.0
    %174 = vmatprep.subr.mxu0 0.0
    %175 = vmatpush2.msra.mxu0 0.0
    %176 = vmatprep.subr.mxu0 0.0
    %177 = vmatpush2.msra.mxu0 0.0
    %178 = vmatprep.subr.mxu0 0.0
    %179 = vmatpush2.msra.mxu0 0.0
    %180 = vmatprep.subr.mxu0 0.0
    %181 = vmatpush2.msra.mxu0 0.0
    %182 = vmatprep.subr.mxu0 0.0
    %183 = vmatpush2.msra.mxu0 0.0
    %184 = vmatprep.subr.mxu0 0.0
    %185 = vmatpush2.msra.mxu0 0.0
    %186 = vmatprep.subr.mxu0 0.0
    %187 = vmatpush2.msra.mxu0 0.0
    %188 = vmatprep.subr.mxu0 0.0
    %189 = vmatpush2.msra.mxu0 0.0
    %190 = vmatprep.mubr.f32.mxu0 0.0
    %191 = vmatmul.mubr.f32.gmra.mxu0 %v101
    %v192 = vpop.f32.mrf.mxu0
    %v193 = vadd.f32 0.0, %v192
    %v194 = vpop.f32.mrf.mxu0
    %195 = vdwg.mxu0
    %v196 = vrot.slane %v193, 4
    %v197 = vadd.f32 %v193, %v196
    %v198 = vrot.slane %v197, 2
    %v199 = vadd.f32 %v197, %v198
    %v200 = vrot.slane %v199, 1
    %v201 = vadd.f32 %v199, %v200
    %v202 = vrcp.pop 8.0
    %v203 = vmul.f32 %v201, %v202
    %v204 = vsub.f32 %v193, %v203
    %v205 = vmul.f32 %v204, %v204
    %v206 = vrot.slane %v205, 4
    %v207 = vadd.f32 %v205, %v206
    %v208 = vrot.slane %v207, 2
    %v209 = vadd.f32 %v207, %v208
    %v210 = vrot.slane %v209, 1
    %v211 = vadd.f32 %v209, %v210
    %v212 = vmul.f32 %v211, %v202
    %v213 = vadd.f32 %v212, 1e-05
    %v214 = vrsqrt.pop %v213
    %v215 = vmul.f32 %v204, %v214
    %v216 = vlaneseq
    %v217 = vshrl.u32 %v216, 7
    %v218 = vsub.s32 0, %v217
    %v219 = vrot.slane %v102, %v218
    %v220 = vmul.f32 %v215, %v219
    %v221 = vlaneseq
    %v222 = vshrl.u32 %v221, 7
    %v223 = vsub.s32 0, %v222
    %v224 = vrot.slane %v103, %v223
    %v225 = vadd.f32 %v220, %v224
    %vm226 = vcmp.gt.f32.partialorder %v225, 0.0
    %v227 = vstv %s107
    %v228 = vmul.f32 %v227, %v225
    %v229 = vsel %vm226, %v225, %v228
    %v230 = vld [vmem:[#allocation8] sm:$0xff]
    %v231 = vld [vmem:[#allocation8 + $0x8] sm:$0xff]
    %v232 = vld [vmem:[#allocation8 + $0x10] sm:$0xff]
    %v233 = vld [vmem:[#allocation8 + $0x18] sm:$0xff]
    %v234 = vld [vmem:[#allocation8 + $0x20] sm:$0xff]
    %v235 = vld [vmem:[#allocation8 + $0x28] sm:$0xff]
    %v236 = vld [vmem:[#allocation8 + $0x30] sm:$0xff]
    %v237 = vld [vmem:[#allocation8 + $0x38] sm:$0xff]
    %v238 = vld [vmem:[#allocation8 + $0x40] sm:$0xff]
    %v239 = vld [vmem:[#allocation8 + $0x48] sm:$0xff]
    %v240 = vld [vmem:[#allocation8 + $0x50] sm:$0xff]
    %v241 = vld [vmem:[#allocation8 + $0x58] sm:$0xff]
    %v242 = vld [vmem:[#allocation8 + $0x60] sm:$0xff]
    %v243 = vld [vmem:[#allocation8 + $0x68] sm:$0xff]
    %v244 = vld [vmem:[#allocation8 + $0x70] sm:$0xff]
    %v245 = vld [vmem:[#allocation8 + $0x78] sm:$0xff]
    %246 = vmatprep.subr.mxu0 0.0
    %247 = vmatpush1.msra.mxu0 %v245
    %248 = vmatprep.subr.mxu0 0.0
    %249 = vmatpush1.msra.mxu0 %v244
    %250 = vmatprep.subr.mxu0 0.0
    %251 = vmatpush1.msra.mxu0 %v243
    %252 = vmatprep.subr.mxu0 0.0
    %253 = vmatpush1.msra.mxu0 %v242
    %254 = vmatprep.subr.mxu0 0.0
    %255 = vmatpush1.msra.mxu0 %v241
    %256 = vmatprep.subr.mxu0 0.0
    %257 = vmatpush1.msra.mxu0 %v240
    %258 = vmatprep.subr.mxu0 0.0
    %259 = vmatpush1.msra.mxu0 %v239
    %260 = vmatprep.subr.mxu0 0.0
    %261 = vmatpush1.msra.mxu0 %v238
    %262 = vmatprep.subr.mxu0 0.0
    %263 = vmatpush1.msra.mxu0 %v237
    %264 = vmatprep.subr.mxu0 0.0
    %265 = vmatpush1.msra.mxu0 %v236
    %266 = vmatprep.subr.mxu0 0.0
    %267 = vmatpush1.msra.mxu0 %v235
    %268 = vmatprep.subr.mxu0 0.0
    %269 = vmatpush1.msra.mxu0 %v234
    %270 = vmatprep.subr.mxu0 0.0
    %271 = vmatpush1.msra.mxu0 %v233
    %272 = vmatprep.subr.mxu0 0.0
    %273 = vmatpush1.msra.mxu0 %v232
    %274 = vmatprep.subr.mxu0 0.0
    %275 = vmatpush1.msra.mxu0 %v231
    %276 = vmatprep.subr.mxu0 0.0
    %277 = vmatpush1.msra.mxu0 %v230
    %278 = vmatprep.subr.mxu0 0.0
    %279 = vmatpush2.msra.mxu0 0.0
    %280 = vmatprep.subr.mxu0 0.0
    %281 = vmatpush2.msra.mxu0 0.0
    %282 = vmatprep.subr.mxu0 0.0
    %283 = vmatpush2.msra.mxu0 0.0
    %284 = vmatprep.subr.mxu0 0.0
    %285 = vmatpush2.msra.mxu0 0.0
    %286 = vmatprep.subr.mxu0 0.0
    %287 = vmatpush2.msra.mxu0 0.0
    %288 = vmatprep.subr.mxu0 0.0
    %289 = vmatpush2.msra.mxu0 0.0
    %290 = vmatprep.subr.mxu0 0.0
    %291 = vmatpush2.msra.mxu0 0.0
    %292 = vmatprep.subr.mxu0 0.0
    %293 = vmatpush2.msra.mxu0 0.0
    %294 = vmatprep.subr.mxu0 0.0
    %295 = vmatpush2.msra.mxu0 0.0
    %296 = vmatprep.subr.mxu0 0.0
    %297 = vmatpush2.msra.mxu0 0.0
    %298 = vmatprep.subr.mxu0 0.0
    %299 = vmatpush2.msra.mxu0 0.0
    %300 = vmatprep.subr.mxu0 0.0
    %301 = vmatpush2.msra.mxu0 0.0
    %302 = vmatprep.subr.mxu0 0.0
    %303 = vmatpush2.msra.mxu0 0.0
    %304 = vmatprep.subr.mxu0 0.0
    %305 = vmatpush2.msra.mxu0 0.0
    %306 = vmatprep.subr.mxu0 0.0
    %307 = vmatpush2.msra.mxu0 0.0
    %308 = vmatprep.subr.mxu0 0.0
    %309 = vmatpush2.msra.mxu0 0.0
    %310 = vmatprep.mubr.f32.mxu0 0.0
    %311 = vmatmul.mubr.f32.gmra.mxu0 %v229
    %v312 = vpop.f32.mrf.mxu0
    %v313 = vadd.f32 0.0, %v312
    %v314 = vpop.f32.mrf.mxu0
    %315 = vdwg.mxu0
    %v316 = vrot.slane %v313, 4
    %v317 = vadd.f32 %v313, %v316
    %v318 = vrot.slane %v317, 2
    %v319 = vadd.f32 %v317, %v318
    %v320 = vrot.slane %v319, 1
    %v321 = vadd.f32 %v319, %v320
    %v322 = vmul.f32 %v321, %v202
    %v323 = vsub.f32 %v313, %v322
    %v324 = vmul.f32 %v323, %v323
    %v325 = vrot.slane %v324, 4
    %v326 = vadd.f32 %v324, %v325
    %v327 = vrot.slane %v326, 2
    %v328 = vadd.f32 %v326, %v327
    %v329 = vrot.slane %v328, 1
    %v330 = vadd.f32 %v328, %v329
    %v331 = vmul.f32 %v330, %v202
    %v332 = vadd.f32 %v331, 1e-05
    %v333 = vrsqrt.pop %v332
    %v334 = vmul.f32 %v323, %v333
    %v335 = vlaneseq
    %v336 = vshrl.u32 %v335, 7
    %v337 = vsub.s32 0, %v336
    %v338 = vrot.slane %v104, %v337
    %v339 = vmul.f32 %v334, %v338
    %v340 = vlaneseq
    %v341 = vshrl.u32 %v340, 7
    %v342 = vsub.s32 0, %v341
    %v343 = vrot.slane %v105, %v342
    %v344 = vadd.f32 %v339, %v343
    %vm345 = vcmp.gt.f32.partialorder %v344, 0.0
    %v346 = vstv %s108
    %v347 = vmul.f32 %v346, %v344
    %v348 = vsel %vm345, %v344, %v347
    %v349 = vld [vmem:[#allocation9] sm:$0xff]
    %v350 = vld [vmem:[#allocation9 + $0x8] sm:$0xff]
    %v351 = vld [vmem:[#allocation9 + $0x10] sm:$0xff]
    %v352 = vld [vmem:[#allocation9 + $0x18] sm:$0xff]
    %v353 = vld [vmem:[#allocation9 + $0x20] sm:$0xff]
    %v354 = vld [vmem:[#allocation9 + $0x28] sm:$0xff]
    %v355 = vld [vmem:[#allocation9 + $0x30] sm:$0xff]
    %v356 = vld [vmem:[#allocation9 + $0x38] sm:$0xff]
    %v357 = vld [vmem:[#allocation9 + $0x40] sm:$0xff]
    %v358 = vld [vmem:[#allocation9 + $0x48] sm:$0xff]
    %v359 = vld [vmem:[#allocation9 + $0x50] sm:$0xff]
    %v360 = vld [vmem:[#allocation9 + $0x58] sm:$0xff]
    %v361 = vld [vmem:[#allocation9 + $0x60] sm:$0xff]
    %v362 = vld [vmem:[#allocation9 + $0x68] sm:$0xff]
    %v363 = vld [vmem:[#allocation9 + $0x70] sm:$0xff]
    %v364 = vld [vmem:[#allocation9 + $0x78] sm:$0xff]
    %v365 = vlaneseq
    %v366 = vshrl.u32 %v365, 7
    %v367 = vsub.s32 0, %v366
    %v368 = vrot.slane %v106, %v367
    %369 = vmatprep.subr.mxu0 0.0
    %370 = vmatpush1.msra.mxu0 %v364
    %371 = vmatprep.subr.mxu0 0.0
    %372 = vmatpush1.msra.mxu0 %v363
    %373 = vmatprep.subr.mxu0 0.0
    %374 = vmatpush1.msra.mxu0 %v362
    %375 = vmatprep.subr.mxu0 0.0
    %376 = vmatpush1.msra.mxu0 %v361
    %377 = vmatprep.subr.mxu0 0.0
    %378 = vmatpush1.msra.mxu0 %v360
    %379 = vmatprep.subr.mxu0 0.0
    %380 = vmatpush1.msra.mxu0 %v359
    %381 = vmatprep.subr.mxu0 0.0
    %382 = vmatpush1.msra.mxu0 %v358
    %383 = vmatprep.subr.mxu0 0.0
    %384 = vmatpush1.msra.mxu0 %v357
    %385 = vmatprep.subr.mxu0 0.0
    %386 = vmatpush1.msra.mxu0 %v356
    %387 = vmatprep.subr.mxu0 0.0
    %388 = vmatpush1.msra.mxu0 %v355
    %389 = vmatprep.subr.mxu0 0.0
    %390 = vmatpush1.msra.mxu0 %v354
    %391 = vmatprep.subr.mxu0 0.0
    %392 = vmatpush1.msra.mxu0 %v353
    %393 = vmatprep.subr.mxu0 0.0
    %394 = vmatpush1.msra.mxu0 %v352
    %395 = vmatprep.subr.mxu0 0.0
    %396 = vmatpush1.msra.mxu0 %v351
    %397 = vmatprep.subr.mxu0 0.0
    %398 = vmatpush1.msra.mxu0 %v350
    %399 = vmatprep.subr.mxu0 0.0
    %400 = vmatpush1.msra.mxu0 %v349
    %401 = vmatprep.subr.mxu0 0.0
    %402 = vmatpush2.msra.mxu0 0.0
    %403 = vmatprep.subr.mxu0 0.0
    %404 = vmatpush2.msra.mxu0 0.0
    %405 = vmatprep.subr.mxu0 0.0
    %406 = vmatpush2.msra.mxu0 0.0
    %407 = vmatprep.subr.mxu0 0.0
    %408 = vmatpush2.msra.mxu0 0.0
    %409 = vmatprep.subr.mxu0 0.0
    %410 = vmatpush2.msra.mxu0 0.0
    %411 = vmatprep.subr.mxu0 0.0
    %412 = vmatpush2.msra.mxu0 0.0
    %413 = vmatprep.subr.mxu0 0.0
    %414 = vmatpush2.msra.mxu0 0.0
    %415 = vmatprep.subr.mxu0 0.0
    %416 = vmatpush2.msra.mxu0 0.0
    %417 = vmatprep.subr.mxu0 0.0
    %418 = vmatpush2.msra.mxu0 0.0
    %419 = vmatprep.subr.mxu0 0.0
    %420 = vmatpush2.msra.mxu0 0.0
    %421 = vmatprep.subr.mxu0 0.0
    %422 = vmatpush2.msra.mxu0 0.0
    %423 = vmatprep.subr.mxu0 0.0
    %424 = vmatpush2.msra.mxu0 0.0
    %425 = vmatprep.subr.mxu0 0.0
    %426 = vmatpush2.msra.mxu0 0.0
    %427 = vmatprep.subr.mxu0 0.0
    %428 = vmatpush2.msra.mxu0 0.0
    %429 = vmatprep.subr.mxu0 0.0
    %430 = vmatpush2.msra.mxu0 0.0
    %431 = vmatprep.subr.mxu0 0.0
    %432 = vmatpush2.msra.mxu0 0.0
    %433 = vmatprep.mubr.f32.mxu0 0.0
    %434 = vmatmul.mubr.f32.gmra.mxu0 %v348
    %v435 = vpop.f32.mrf.mxu0
    %v436 = vadd.f32 %v368, %v435
    %v437 = vpop.f32.mrf.mxu0
    %438 = vdwg.mxu0
    %v439 = vstv %s109
    %v440 = vmul.f32 %v439, %v436
    %s441 = ssub.f32 1.0, %s109
    %v442 = vstv %s441
    %v443 = vmul.f32 %v442, %v101
    %v444 = vadd.f32 %v440, %v443
    %445 = vst [vmem:[#allocation13] sm:$0xff] %v444
    // Predicated region
    $region50: #{tpu_custom_call.1} parent=1 // pred_check
      _
    $region51: #{tpu_custom_call.1} parent=1 // pred_check_branch
      %447 = sbr.rel (0) target = $region53
    $region52: #{tpu_custom_call.1} parent=1 // pred_region
      %s449 = ssub.s32 128, 128
      %450 = vsyncadd [#allocation4], %s449
      %s452 = sshll.u32 [#allocation13], 4
      %s453 = int_to_ptr.vmem [resolvable:$true] %s452
      %455 = dma.vmem_to_hbm [thread:$0]  %s453, 128, %s6, [#allocation4]
    $region53: #{tpu_custom_call.1} parent=1 // pred_fallthru
      _
    // Predicated region
    $region54: #{tpu_custom_call.1} parent=1 // pred_check
      _
    $region55: #{tpu_custom_call.1} parent=1 // pred_check_branch
      %457 = sbr.rel (0) target = $region57
    $region56: #{tpu_custom_call.1} parent=1 // pred_region
      %458 = dma.done [#allocation4], 128
    $region57: #{tpu_custom_call.1} parent=1 // pred_fallthru
      _
    %459 = vsyncpa [#allocation3], 1
    %460 = vsyncpa [#allocation7], 1
    %461 = vsyncpa [#allocation10], 1
    %462 = vsyncpa [#allocation4], 1
    %463 = vsyncpa [#allocation5], 1

</llo_original>
